<compile_context>
chip_gen: v7x
topology: tpu7x:2x2x1
jax: 0.10.0
libtpu: 0.0.40
codegen_flags: <defaults>
</compile_context>

<pallas_src>
import jax
import jax.numpy as jnp
from jax.experimental import pallas as pl
from jax.experimental.pallas import tpu as pltpu
import numpy as np

EPS = 1e-5


def dqn_kernel(x_ref,
               w1_ref, g1_ref, be1_ref,
               w2_ref, g2_ref, be2_ref,
               w3_ref, g3_ref, be3_ref,
               w4_ref, b4_ref,
               o_ref):
    inv_b = 1.0 / x_ref.shape[0]  # static

    def matmul(h_f32, w_ref):
        # bf16 operands on the MXU, f32 accumulation.
        return jnp.dot(h_f32.astype(jnp.bfloat16), w_ref[...],
                       preferred_element_type=jnp.float32)

    def bn_relu(h, g_ref, be_ref):
        # Single-pass, training-mode BatchNorm1d (biased variance) folded into
        # one scale/shift, all elementwise math in f32.
        s1 = jnp.sum(h, axis=0, keepdims=True)        # (1, N)
        s2 = jnp.sum(h * h, axis=0, keepdims=True)    # (1, N) -- independent reduction
        mean = s1 * inv_b
        var = jnp.maximum(s2 * inv_b - mean * mean, 0.0)
        scale = g_ref[...] * jax.lax.rsqrt(var + EPS)  # (1, N), EUP rsqrt
        shift = be_ref[...] - mean * scale             # (1, N)
        return jnp.maximum(h * scale + shift, 0.0)

    h = bn_relu(matmul(x_ref[...], w1_ref), g1_ref, be1_ref)
    h = bn_relu(matmul(h, w2_ref), g2_ref, be2_ref)
    h = bn_relu(matmul(h, w3_ref), g3_ref, be3_ref)
    # Final layer keeps its bias (no BN after it).  outputs=2 pads to a 128-lane tile;
    # negligible here -- if the action space grows, keep the last dim a multiple of 128.
    o_ref[...] = matmul(h, w4_ref) + b4_ref[...]


def dqn_forward(x, params):
    """x: (B, inputs) f32. params: dict of f32 weights (see init_params)."""
    B = x.shape[0]
    outputs = params["w4"].shape[1]
    bf16 = jnp.bfloat16

    # b1/b2/b3 are intentionally NOT passed: cancelled exactly by the following BN.
    args = (
        x,
        params["w1"].astype(bf16), params["g1"], params["be1"],
        params["w2"].astype(bf16), params["g2"], params["be2"],
        params["w3"].astype(bf16), params["g3"], params["be3"],
        params["w4"].astype(bf16), params["b4"],
    )

    # Crude VMEM budget for the whole-batch-resident design (padded activations + weights,
    # with headroom), clamped safely below v7x's 64 MiB physical VMEM.
    widest = max(128, params["w1"].shape[1])
    act_bytes = 4 * B * widest * 4
    weight_bytes = sum(int(np.prod(v.shape)) for v in params.values()) * 4
    vmem_limit = int(min(56 * 2**20, max(16 * 2**20, 2 * (act_bytes + weight_bytes))))

    vmem_spec = pl.BlockSpec(memory_space=pltpu.MemorySpace.VMEM)
    return pl.pallas_call(
        dqn_kernel,
        out_shape=jax.ShapeDtypeStruct((B, outputs), jnp.float32),
        in_specs=[vmem_spec] * len(args),
        out_specs=vmem_spec,
        compiler_params=pltpu.CompilerParams(vmem_limit_bytes=vmem_limit),
    )(*args)


def init_params(key, inputs, outputs, hidden_size=128):
    """Deterministic init mimicking PyTorch nn.Linear (U[-1/sqrt(fan_in), 1/sqrt(fan_in)]).
    Linear weights stored as (in_features, out_features); BN gamma=1, beta=0 kept as
    (1, N) rows for lane-major broadcast inside the kernel.  All f32."""
    dims = [(inputs, hidden_size), (hidden_size, 64), (64, 32), (32, outputs)]
    params = {}
    for i, (fin, fout) in enumerate(dims, start=1):
        key, kw, kb = jax.random.split(key, 3)
        bound = 1.0 / np.sqrt(fin)
        params[f"w{i}"] = jax.random.uniform(kw, (fin, fout), jnp.float32, -bound, bound)
        params[f"b{i}"] = jax.random.uniform(kb, (1, fout), jnp.float32, -bound, bound)
    for i, n in zip((1, 2, 3), (hidden_size, 64, 32)):
        params[f"g{i}"] = jnp.ones((1, n), jnp.float32)
        params[f"be{i}"] = jnp.zeros((1, n), jnp.float32)
    return params


def dqn_reference(x, params):
    """Pure-JAX f32 reference of the original module forward (training-mode BN,
    includes the b1/b2/b3 biases that the kernel provably drops)."""
    def bn_relu(h, g, be):
        mean = jnp.mean(h, axis=0, keepdims=True)
        var = jnp.mean((h - mean) ** 2, axis=0, keepdims=True)
        return jnp.maximum((h - mean) / jnp.sqrt(var + EPS) * g + be, 0.0)

    h = x @ params["w1"] + params["b1"]
    h = bn_relu(h, params["g1"], params["be1"])
    h = h @ params["w2"] + params["b2"]
    h = bn_relu(h, params["g2"], params["be2"])
    h = h @ params["w3"] + params["b3"]
    h = bn_relu(h, params["g3"], params["be3"])
    return h @ params["w4"] + params["b4"]


if __name__ == "__main__":
    key = jax.random.PRNGKey(0)
    key, kx, kp = jax.random.split(key, 3)

    # B a multiple of 8 sublanes and large enough to amortize launch/DMA latency.
    B, INPUTS, OUTPUTS, HIDDEN = 128, 4, 2, 128
    x = jax.random.normal(kx, (B, INPUTS), jnp.float32)
    params = init_params(kp, INPUTS, OUTPUTS, HIDDEN)

    out = jax.block_until_ready(dqn_forward(x, params))
    ref = dqn_reference(x, params)

    # Loose-ish tolerance: the kernel uses bf16 MXU operands (f32 accumulation) and
    # single-pass variance; everything else (bias cancellation, folded BN) is exact.
    np.testing.assert_allclose(np.asarray(out), np.asarray(ref), rtol=2e-2, atol=2e-2)

    print("KERNEL_OK")
</pallas_src>

<mosaic_0001>
module attributes {stable_mosaic.version = 11 : i64} {
  func.func @dqn_kernel(%arg0: memref<128x4xf32, #tpu.memory_space<vmem>>, %arg1: memref<4x128xbf16, #tpu.memory_space<vmem>>, %arg2: memref<1x128xf32, #tpu.memory_space<vmem>>, %arg3: memref<1x128xf32, #tpu.memory_space<vmem>>, %arg4: memref<128x64xbf16, #tpu.memory_space<vmem>>, %arg5: memref<1x64xf32, #tpu.memory_space<vmem>>, %arg6: memref<1x64xf32, #tpu.memory_space<vmem>>, %arg7: memref<64x32xbf16, #tpu.memory_space<vmem>>, %arg8: memref<1x32xf32, #tpu.memory_space<vmem>>, %arg9: memref<1x32xf32, #tpu.memory_space<vmem>>, %arg10: memref<32x2xbf16, #tpu.memory_space<vmem>>, %arg11: memref<1x2xf32, #tpu.memory_space<vmem>>, %arg12: memref<128x2xf32, #tpu.memory_space<vmem>>) attributes {dimension_semantics = [], scalar_prefetch = 0 : i64, scratch_operands = 0 : i64, tpu.core_type = #tpu.core_type<tc>} {
    %c0 = arith.constant 0 : index
    %c0_0 = arith.constant 0 : index
    %0 = vector.load %arg0[%c0, %c0_0] : memref<128x4xf32, #tpu.memory_space<vmem>>, vector<128x4xf32>
    %1 = arith.truncf %0 : vector<128x4xf32> to vector<128x4xbf16>
    %c0_1 = arith.constant 0 : index
    %c0_2 = arith.constant 0 : index
    %2 = vector.load %arg1[%c0_1, %c0_2] : memref<4x128xbf16, #tpu.memory_space<vmem>>, vector<4x128xbf16>
    %cst = arith.constant dense<0.000000e+00> : vector<128x128xf32>
    %3 = tpu.matmul %1, %2, %cst {dimension_numbers = #tpu.dot_dimension_numbers<[1], [0], [0], [1], [0, 0, 1, 1], [], []>} : vector<128x4xbf16>, vector<4x128xbf16>, vector<128x128xf32> -> vector<128x128xf32>
    %cst_3 = arith.constant dense<0.000000e+00> : vector<128xf32>
    %4 = vector.multi_reduction <add>, %3, %cst_3 [0] : vector<128x128xf32> to vector<128xf32>
    %5 = vector.shape_cast %4 : vector<128xf32> to vector<1x128xf32>
    %6 = arith.mulf %3, %3 : vector<128x128xf32>
    %cst_4 = arith.constant dense<0.000000e+00> : vector<128xf32>
    %7 = vector.multi_reduction <add>, %6, %cst_4 [0] : vector<128x128xf32> to vector<128xf32>
    %8 = vector.shape_cast %7 : vector<128xf32> to vector<1x128xf32>
    %cst_5 = arith.constant 7.812500e-03 : f32
    %9 = vector.broadcast %cst_5 : f32 to vector<1x128xf32>
    %10 = arith.mulf %5, %9 : vector<1x128xf32>
    %cst_6 = arith.constant 7.812500e-03 : f32
    %11 = vector.broadcast %cst_6 : f32 to vector<1x128xf32>
    %12 = arith.mulf %8, %11 : vector<1x128xf32>
    %13 = arith.mulf %10, %10 : vector<1x128xf32>
    %14 = arith.subf %12, %13 : vector<1x128xf32>
    %cst_7 = arith.constant 0.000000e+00 : f32
    %15 = vector.broadcast %cst_7 : f32 to vector<1x128xf32>
    %16 = arith.maximumf %14, %15 : vector<1x128xf32>
    %c0_8 = arith.constant 0 : index
    %c0_9 = arith.constant 0 : index
    %17 = vector.load %arg2[%c0_8, %c0_9] : memref<1x128xf32, #tpu.memory_space<vmem>>, vector<1x128xf32>
    %cst_10 = arith.constant 9.99999974E-6 : f32
    %18 = vector.broadcast %cst_10 : f32 to vector<1x128xf32>
    %19 = arith.addf %16, %18 : vector<1x128xf32>
    %20 = math.rsqrt %19 : vector<1x128xf32>
    %21 = arith.mulf %17, %20 : vector<1x128xf32>
    %c0_11 = arith.constant 0 : index
    %c0_12 = arith.constant 0 : index
    %22 = vector.load %arg3[%c0_11, %c0_12] : memref<1x128xf32, #tpu.memory_space<vmem>>, vector<1x128xf32>
    %23 = arith.mulf %10, %21 : vector<1x128xf32>
    %24 = arith.subf %22, %23 : vector<1x128xf32>
    %25 = vector.broadcast %21 : vector<1x128xf32> to vector<128x128xf32>
    %26 = arith.mulf %3, %25 : vector<128x128xf32>
    %27 = vector.broadcast %24 : vector<1x128xf32> to vector<128x128xf32>
    %28 = arith.addf %26, %27 : vector<128x128xf32>
    %cst_13 = arith.constant 0.000000e+00 : f32
    %29 = vector.broadcast %cst_13 : f32 to vector<128x128xf32>
    %30 = arith.maximumf %28, %29 : vector<128x128xf32>
    %31 = arith.truncf %30 : vector<128x128xf32> to vector<128x128xbf16>
    %c0_14 = arith.constant 0 : index
    %c0_15 = arith.constant 0 : index
    %32 = vector.load %arg4[%c0_14, %c0_15] : memref<128x64xbf16, #tpu.memory_space<vmem>>, vector<128x64xbf16>
    %cst_16 = arith.constant dense<0.000000e+00> : vector<128x64xf32>
    %33 = tpu.matmul %31, %32, %cst_16 {dimension_numbers = #tpu.dot_dimension_numbers<[1], [0], [0], [1], [0, 0, 1, 1], [], []>} : vector<128x128xbf16>, vector<128x64xbf16>, vector<128x64xf32> -> vector<128x64xf32>
    %cst_17 = arith.constant dense<0.000000e+00> : vector<64xf32>
    %34 = vector.multi_reduction <add>, %33, %cst_17 [0] : vector<128x64xf32> to vector<64xf32>
    %35 = vector.shape_cast %34 : vector<64xf32> to vector<1x64xf32>
    %36 = arith.mulf %33, %33 : vector<128x64xf32>
    %cst_18 = arith.constant dense<0.000000e+00> : vector<64xf32>
    %37 = vector.multi_reduction <add>, %36, %cst_18 [0] : vector<128x64xf32> to vector<64xf32>
    %38 = vector.shape_cast %37 : vector<64xf32> to vector<1x64xf32>
    %cst_19 = arith.constant 7.812500e-03 : f32
    %39 = vector.broadcast %cst_19 : f32 to vector<1x64xf32>
    %40 = arith.mulf %35, %39 : vector<1x64xf32>
    %cst_20 = arith.constant 7.812500e-03 : f32
    %41 = vector.broadcast %cst_20 : f32 to vector<1x64xf32>
    %42 = arith.mulf %38, %41 : vector<1x64xf32>
    %43 = arith.mulf %40, %40 : vector<1x64xf32>
    %44 = arith.subf %42, %43 : vector<1x64xf32>
    %cst_21 = arith.constant 0.000000e+00 : f32
    %45 = vector.broadcast %cst_21 : f32 to vector<1x64xf32>
    %46 = arith.maximumf %44, %45 : vector<1x64xf32>
    %c0_22 = arith.constant 0 : index
    %c0_23 = arith.constant 0 : index
    %47 = vector.load %arg5[%c0_22, %c0_23] : memref<1x64xf32, #tpu.memory_space<vmem>>, vector<1x64xf32>
    %cst_24 = arith.constant 9.99999974E-6 : f32
    %48 = vector.broadcast %cst_24 : f32 to vector<1x64xf32>
    %49 = arith.addf %46, %48 : vector<1x64xf32>
    %50 = math.rsqrt %49 : vector<1x64xf32>
    %51 = arith.mulf %47, %50 : vector<1x64xf32>
    %c0_25 = arith.constant 0 : index
    %c0_26 = arith.constant 0 : index
    %52 = vector.load %arg6[%c0_25, %c0_26] : memref<1x64xf32, #tpu.memory_space<vmem>>, vector<1x64xf32>
    %53 = arith.mulf %40, %51 : vector<1x64xf32>
    %54 = arith.subf %52, %53 : vector<1x64xf32>
    %55 = vector.broadcast %51 : vector<1x64xf32> to vector<128x64xf32>
    %56 = arith.mulf %33, %55 : vector<128x64xf32>
    %57 = vector.broadcast %54 : vector<1x64xf32> to vector<128x64xf32>
    %58 = arith.addf %56, %57 : vector<128x64xf32>
    %cst_27 = arith.constant 0.000000e+00 : f32
    %59 = vector.broadcast %cst_27 : f32 to vector<128x64xf32>
    %60 = arith.maximumf %58, %59 : vector<128x64xf32>
    %61 = arith.truncf %60 : vector<128x64xf32> to vector<128x64xbf16>
    %c0_28 = arith.constant 0 : index
    %c0_29 = arith.constant 0 : index
    %62 = vector.load %arg7[%c0_28, %c0_29] : memref<64x32xbf16, #tpu.memory_space<vmem>>, vector<64x32xbf16>
    %cst_30 = arith.constant dense<0.000000e+00> : vector<128x32xf32>
    %63 = tpu.matmul %61, %62, %cst_30 {dimension_numbers = #tpu.dot_dimension_numbers<[1], [0], [0], [1], [0, 0, 1, 1], [], []>} : vector<128x64xbf16>, vector<64x32xbf16>, vector<128x32xf32> -> vector<128x32xf32>
    %cst_31 = arith.constant dense<0.000000e+00> : vector<32xf32>
    %64 = vector.multi_reduction <add>, %63, %cst_31 [0] : vector<128x32xf32> to vector<32xf32>
    %65 = vector.shape_cast %64 : vector<32xf32> to vector<1x32xf32>
    %66 = arith.mulf %63, %63 : vector<128x32xf32>
    %cst_32 = arith.constant dense<0.000000e+00> : vector<32xf32>
    %67 = vector.multi_reduction <add>, %66, %cst_32 [0] : vector<128x32xf32> to vector<32xf32>
    %68 = vector.shape_cast %67 : vector<32xf32> to vector<1x32xf32>
    %cst_33 = arith.constant 7.812500e-03 : f32
    %69 = vector.broadcast %cst_33 : f32 to vector<1x32xf32>
    %70 = arith.mulf %65, %69 : vector<1x32xf32>
    %cst_34 = arith.constant 7.812500e-03 : f32
    %71 = vector.broadcast %cst_34 : f32 to vector<1x32xf32>
    %72 = arith.mulf %68, %71 : vector<1x32xf32>
    %73 = arith.mulf %70, %70 : vector<1x32xf32>
    %74 = arith.subf %72, %73 : vector<1x32xf32>
    %cst_35 = arith.constant 0.000000e+00 : f32
    %75 = vector.broadcast %cst_35 : f32 to vector<1x32xf32>
    %76 = arith.maximumf %74, %75 : vector<1x32xf32>
    %c0_36 = arith.constant 0 : index
    %c0_37 = arith.constant 0 : index
    %77 = vector.load %arg8[%c0_36, %c0_37] : memref<1x32xf32, #tpu.memory_space<vmem>>, vector<1x32xf32>
    %cst_38 = arith.constant 9.99999974E-6 : f32
    %78 = vector.broadcast %cst_38 : f32 to vector<1x32xf32>
    %79 = arith.addf %76, %78 : vector<1x32xf32>
    %80 = math.rsqrt %79 : vector<1x32xf32>
    %81 = arith.mulf %77, %80 : vector<1x32xf32>
    %c0_39 = arith.constant 0 : index
    %c0_40 = arith.constant 0 : index
    %82 = vector.load %arg9[%c0_39, %c0_40] : memref<1x32xf32, #tpu.memory_space<vmem>>, vector<1x32xf32>
    %83 = arith.mulf %70, %81 : vector<1x32xf32>
    %84 = arith.subf %82, %83 : vector<1x32xf32>
    %85 = vector.broadcast %81 : vector<1x32xf32> to vector<128x32xf32>
    %86 = arith.mulf %63, %85 : vector<128x32xf32>
    %87 = vector.broadcast %84 : vector<1x32xf32> to vector<128x32xf32>
    %88 = arith.addf %86, %87 : vector<128x32xf32>
    %cst_41 = arith.constant 0.000000e+00 : f32
    %89 = vector.broadcast %cst_41 : f32 to vector<128x32xf32>
    %90 = arith.maximumf %88, %89 : vector<128x32xf32>
    %91 = arith.truncf %90 : vector<128x32xf32> to vector<128x32xbf16>
    %c0_42 = arith.constant 0 : index
    %c0_43 = arith.constant 0 : index
    %92 = vector.load %arg10[%c0_42, %c0_43] : memref<32x2xbf16, #tpu.memory_space<vmem>>, vector<32x2xbf16>
    %cst_44 = arith.constant dense<0.000000e+00> : vector<128x2xf32>
    %93 = tpu.matmul %91, %92, %cst_44 {dimension_numbers = #tpu.dot_dimension_numbers<[1], [0], [0], [1], [0, 0, 1, 1], [], []>} : vector<128x32xbf16>, vector<32x2xbf16>, vector<128x2xf32> -> vector<128x2xf32>
    %c0_45 = arith.constant 0 : index
    %c0_46 = arith.constant 0 : index
    %94 = vector.load %arg11[%c0_45, %c0_46] : memref<1x2xf32, #tpu.memory_space<vmem>>, vector<1x2xf32>
    %95 = vector.broadcast %94 : vector<1x2xf32> to vector<128x2xf32>
    %96 = arith.addf %93, %95 : vector<128x2xf32>
    %c0_47 = arith.constant 0 : index
    %c0_48 = arith.constant 0 : index
    %97 = vector.load %arg12[%c0_47, %c0_48] : memref<128x2xf32, #tpu.memory_space<vmem>>, vector<128x2xf32>
    tpu.vector_store %arg12[%c0_47, %c0_48], %96 {strides = array<i32>} : memref<128x2xf32, #tpu.memory_space<vmem>>, vector<128x2xf32>,
    return
  }
}

</mosaic_0001>

<llo_original>
// kernel: tpu_custom_call.1
$region0: #{tpu_custom_call.1}
  #allocation0 [shape = 'u32[]', space=smem, size = 0x4, offset = 0x4, fixed_abs, tag = 'smem constant byte address 0x4 - core index']
  #allocation1 [shape = 'u32[144,128]{1,0:T(1,128)}', space=vmem, size = 0x12000, scoped, tag = 'internal scratch']
  %s0 = inlined_call_operand.vmem [shape: f32[128,4], index: 0, kind: input, shape index: {}]
  %s1 = inlined_call_operand.vmem [shape: bf16[4,128], index: 1, kind: input, shape index: {}]
  %s2 = inlined_call_operand.vmem [shape: f32[1,128], index: 2, kind: input, shape index: {}]
  %s3 = inlined_call_operand.vmem [shape: f32[1,128], index: 3, kind: input, shape index: {}]
  %s4 = inlined_call_operand.vmem [shape: bf16[128,64], index: 4, kind: input, shape index: {}]
  %s5 = inlined_call_operand.vmem [shape: f32[1,64], index: 5, kind: input, shape index: {}]
  %s6 = inlined_call_operand.vmem [shape: f32[1,64], index: 6, kind: input, shape index: {}]
  %s7 = inlined_call_operand.vmem [shape: bf16[64,32], index: 7, kind: input, shape index: {}]
  %s8 = inlined_call_operand.vmem [shape: f32[1,32], index: 8, kind: input, shape index: {}]
  %s9 = inlined_call_operand.vmem [shape: f32[1,32], index: 9, kind: input, shape index: {}]
  %s10 = inlined_call_operand.vmem [shape: bf16[32,2], index: 10, kind: input, shape index: {}]
  %s11 = inlined_call_operand.vmem [shape: f32[1,2], index: 11, kind: input, shape index: {}]
  %s12 = inlined_call_operand.vmem [shape: f32[128,2], index: 12, kind: output, shape index: {}]
  %s13 = sld [smem:[#allocation0]]
  $region58: #{tpu_custom_call.1} parent=0
    _
  %s15 = ssub.s32 1, %s13
  %s16 = scalar_select 0, %s15, %s13
  // Predicated region
  $region2: #{tpu_custom_call.1} parent=0 // pred_check
    _
  $region3: #{tpu_custom_call.1} parent=0 // pred_check_branch
    %18 = sbr.rel (0) target = $region5
  $region4: #{tpu_custom_call.1} parent=0 // pred_region
    _
  $region5: #{tpu_custom_call.1} parent=0 // pred_fallthru
    _
  // Predicated region
  $region6: #{tpu_custom_call.1} parent=0 // pred_check
    _
  $region7: #{tpu_custom_call.1} parent=0 // pred_check_branch
    %20 = sbr.rel (0) target = $region9
  $region8: #{tpu_custom_call.1} parent=0 // pred_region
    _
  $region9: #{tpu_custom_call.1} parent=0 // pred_fallthru
    _
  // Predicated region
  $region10: #{tpu_custom_call.1} parent=0 // pred_check
    _
  $region11: #{tpu_custom_call.1} parent=0 // pred_check_branch
    %22 = sbr.rel (0) target = $region13
  $region12: #{tpu_custom_call.1} parent=0 // pred_region
    _
  $region13: #{tpu_custom_call.1} parent=0 // pred_fallthru
    _
  // Predicated region
  $region14: #{tpu_custom_call.1} parent=0 // pred_check
    _
  $region15: #{tpu_custom_call.1} parent=0 // pred_check_branch
    %24 = sbr.rel (0) target = $region17
  $region16: #{tpu_custom_call.1} parent=0 // pred_region
    _
  $region17: #{tpu_custom_call.1} parent=0 // pred_fallthru
    _
  // Predicated region
  $region18: #{tpu_custom_call.1} parent=0 // pred_check
    _
  $region19: #{tpu_custom_call.1} parent=0 // pred_check_branch
    %26 = sbr.rel (0) target = $region21
  $region20: #{tpu_custom_call.1} parent=0 // pred_region
    _
  $region21: #{tpu_custom_call.1} parent=0 // pred_fallthru
    _
  // Predicated region
  $region22: #{tpu_custom_call.1} parent=0 // pred_check
    _
  $region23: #{tpu_custom_call.1} parent=0 // pred_check_branch
    %28 = sbr.rel (0) target = $region25
  $region24: #{tpu_custom_call.1} parent=0 // pred_region
    _
  $region25: #{tpu_custom_call.1} parent=0 // pred_fallthru
    _
  // Predicated region
  $region26: #{tpu_custom_call.1} parent=0 // pred_check
    _
  $region27: #{tpu_custom_call.1} parent=0 // pred_check_branch
    %30 = sbr.rel (0) target = $region29
  $region28: #{tpu_custom_call.1} parent=0 // pred_region
    _
  $region29: #{tpu_custom_call.1} parent=0 // pred_fallthru
    _
  // Predicated region
  $region30: #{tpu_custom_call.1} parent=0 // pred_check
    _
  $region31: #{tpu_custom_call.1} parent=0 // pred_check_branch
    %32 = sbr.rel (0) target = $region33
  $region32: #{tpu_custom_call.1} parent=0 // pred_region
    _
  $region33: #{tpu_custom_call.1} parent=0 // pred_fallthru
    _
  // Predicated region
  $region34: #{tpu_custom_call.1} parent=0 // pred_check
    _
  $region35: #{tpu_custom_call.1} parent=0 // pred_check_branch
    %34 = sbr.rel (0) target = $region37
  $region36: #{tpu_custom_call.1} parent=0 // pred_region
    _
  $region37: #{tpu_custom_call.1} parent=0 // pred_fallthru
    _
  // Predicated region
  $region38: #{tpu_custom_call.1} parent=0 // pred_check
    _
  $region39: #{tpu_custom_call.1} parent=0 // pred_check_branch
    %36 = sbr.rel (0) target = $region41
  $region40: #{tpu_custom_call.1} parent=0 // pred_region
    _
  $region41: #{tpu_custom_call.1} parent=0 // pred_fallthru
    _
  // Predicated region
  $region42: #{tpu_custom_call.1} parent=0 // pred_check
    _
  $region43: #{tpu_custom_call.1} parent=0 // pred_check_branch
    %38 = sbr.rel (0) target = $region45
  $region44: #{tpu_custom_call.1} parent=0 // pred_region
    _
  $region45: #{tpu_custom_call.1} parent=0 // pred_fallthru
    _
  // Predicated region
  $region46: #{tpu_custom_call.1} parent=0 // pred_check
    _
  $region47: #{tpu_custom_call.1} parent=0 // pred_check_branch
    %40 = sbr.rel (0) target = $region49
  $region48: #{tpu_custom_call.1} parent=0 // pred_region
    _
  $region49: #{tpu_custom_call.1} parent=0 // pred_fallthru
    _
  %v42 = vld [vmem:[%s0] sm:$0xff]
  %v43 = vld [vmem:[%s0 + $0x8] sm:$0xff]
  %v44 = vld [vmem:[%s0 + $0x10] sm:$0xff]
  %v45 = vld [vmem:[%s0 + $0x18] sm:$0xff]
  %v46 = vld [vmem:[%s0 + $0x20] sm:$0xff]
  %v47 = vld [vmem:[%s0 + $0x28] sm:$0xff]
  %v48 = vld [vmem:[%s0 + $0x30] sm:$0xff]
  %v49 = vld [vmem:[%s0 + $0x38] sm:$0xff]
  %v50 = vld [vmem:[%s0 + $0x40] sm:$0xff]
  %v51 = vld [vmem:[%s0 + $0x48] sm:$0xff]
  %v52 = vld [vmem:[%s0 + $0x50] sm:$0xff]
  %v53 = vld [vmem:[%s0 + $0x58] sm:$0xff]
  %v54 = vld [vmem:[%s0 + $0x60] sm:$0xff]
  %v55 = vld [vmem:[%s0 + $0x68] sm:$0xff]
  %v56 = vld [vmem:[%s0 + $0x70] sm:$0xff]
  %v57 = vld [vmem:[%s0 + $0x78] sm:$0xff]
  %v58 = vpack.c.bf16 %v43, %v42
  %v59 = vpack.c.bf16 %v45, %v44
  %v60 = vpack.c.bf16 %v47, %v46
  %v61 = vpack.c.bf16 %v49, %v48
  %v62 = vpack.c.bf16 %v51, %v50
  %v63 = vpack.c.bf16 %v53, %v52
  %v64 = vpack.c.bf16 %v55, %v54
  %v65 = vpack.c.bf16 %v57, %v56
  %v66 = vld [vmem:[%s1] sm:$0x3]
  %vm67 = vcmask 31744
  %v69 = vsel %vm67, %v58, 0
  %v72 = vsel %vm67, %v59, 0
  %v75 = vsel %vm67, %v60, 0
  %v78 = vsel %vm67, %v61, 0
  %v81 = vsel %vm67, %v62, 0
  %v84 = vsel %vm67, %v63, 0
  %v87 = vsel %vm67, %v64, 0
  %v90 = vsel %vm67, %v65, 0
  %vm92 = vcmask 1041408
  %v94 = vsel %vm92, %v66, 0
  %96 = vmatprep.subr.bf16.mxu0 0
  %97 = vmatpush1.bf16.msra.mxu0 %v94
  %98 = vmatprep.subr.bf16.mxu0 0
  %99 = vmatpush1.bf16.msra.mxu0 0
  %100 = vmatprep.subr.bf16.mxu0 0
  %101 = vmatpush1.bf16.msra.mxu0 0
  %102 = vmatprep.subr.bf16.mxu0 0
  %103 = vmatpush1.bf16.msra.mxu0 0
  %104 = vmatprep.subr.bf16.mxu0 0
  %105 = vmatpush1.bf16.msra.mxu0 0
  %106 = vmatprep.subr.bf16.mxu0 0
  %107 = vmatpush1.bf16.msra.mxu0 0
  %108 = vmatprep.subr.bf16.mxu0 0
  %109 = vmatpush1.bf16.msra.mxu0 0
  %110 = vmatprep.subr.bf16.mxu0 0
  %111 = vmatpush1.bf16.msra.mxu0 0
  %112 = vmatprep.subr.bf16.mxu0 0
  %113 = vmatpush1.bf16.msra.mxu0 0
  %114 = vmatprep.subr.bf16.mxu0 0
  %115 = vmatpush1.bf16.msra.mxu0 0
  %116 = vmatprep.subr.bf16.mxu0 0
  %117 = vmatpush1.bf16.msra.mxu0 0
  %118 = vmatprep.subr.bf16.mxu0 0
  %119 = vmatpush1.bf16.msra.mxu0 0
  %120 = vmatprep.subr.bf16.mxu0 0
  %121 = vmatpush1.bf16.msra.mxu0 0
  %122 = vmatprep.subr.bf16.mxu0 0
  %123 = vmatpush1.bf16.msra.mxu0 0
  %124 = vmatprep.subr.bf16.mxu0 0
  %125 = vmatpush1.bf16.msra.mxu0 0
  %126 = vmatprep.subr.bf16.mxu0 0
  %127 = vmatpush1.bf16.msra.mxu0 0
  %128 = vmatprep.mubr.bf16.mxu0 0
  %129 = vmatmul.mubr.bf16.gmra.mrb[0].mxu0 %v69
  %v130 = vpop.f32.mrb[0].mxu0
  %v131 = vadd.f32 0.0, %v130
  %v132 = vpop.f32.mrb[0].mxu0
  %v133 = vpop.f32.mrb[0].mxu0
  %v134 = vadd.f32 0.0, %v133
  %v135 = vpop.f32.mrb[0].mxu0
  %136 = vmatprep.mubr.bf16.mxu0 0
  %137 = vmatmul.mubr.bf16.gmra.mrb[0].mxu0 %v72
  %v138 = vpop.f32.mrb[0].mxu0
  %v139 = vadd.f32 0.0, %v138
  %v140 = vpop.f32.mrb[0].mxu0
  %v141 = vpop.f32.mrb[0].mxu0
  %v142 = vadd.f32 0.0, %v141
  %v143 = vpop.f32.mrb[0].mxu0
  %144 = vmatprep.mubr.bf16.mxu0 0
  %145 = vmatmul.mubr.bf16.gmra.mrb[0].mxu0 %v75
  %v146 = vpop.f32.mrb[0].mxu0
  %v147 = vadd.f32 0.0, %v146
  %v148 = vpop.f32.mrb[0].mxu0
  %v149 = vpop.f32.mrb[0].mxu0
  %v150 = vadd.f32 0.0, %v149
  %v151 = vpop.f32.mrb[0].mxu0
  %152 = vmatprep.mubr.bf16.mxu0 0
  %153 = vmatmul.mubr.bf16.gmra.mrb[0].mxu0 %v78
  %v154 = vpop.f32.mrb[0].mxu0
  %v155 = vadd.f32 0.0, %v154
  %v156 = vpop.f32.mrb[0].mxu0
  %v157 = vpop.f32.mrb[0].mxu0
  %v158 = vadd.f32 0.0, %v157
  %v159 = vpop.f32.mrb[0].mxu0
  %160 = vmatprep.mubr.bf16.mxu0 0
  %161 = vmatmul.mubr.bf16.gmra.mrb[0].mxu0 %v81
  %v162 = vpop.f32.mrb[0].mxu0
  %v163 = vadd.f32 0.0, %v162
  %v164 = vpop.f32.mrb[0].mxu0
  %v165 = vpop.f32.mrb[0].mxu0
  %v166 = vadd.f32 0.0, %v165
  %v167 = vpop.f32.mrb[0].mxu0
  %168 = vmatprep.mubr.bf16.mxu0 0
  %169 = vmatmul.mubr.bf16.gmra.mrb[0].mxu0 %v84
  %v170 = vpop.f32.mrb[0].mxu0
  %v171 = vadd.f32 0.0, %v170
  %v172 = vpop.f32.mrb[0].mxu0
  %v173 = vpop.f32.mrb[0].mxu0
  %v174 = vadd.f32 0.0, %v173
  %v175 = vpop.f32.mrb[0].mxu0
  %176 = vmatprep.mubr.bf16.mxu0 0
  %177 = vmatmul.mubr.bf16.gmra.mrb[0].mxu0 %v87
  %v178 = vpop.f32.mrb[0].mxu0
  %v179 = vadd.f32 0.0, %v178
  %v180 = vpop.f32.mrb[0].mxu0
  %v181 = vpop.f32.mrb[0].mxu0
  %v182 = vadd.f32 0.0, %v181
  %v183 = vpop.f32.mrb[0].mxu0
  %184 = vmatprep.mubr.bf16.mxu0 0
  %185 = vmatmul.mubr.bf16.gmra.mrb[0].mxu0 %v90
  %v186 = vpop.f32.mrb[0].mxu0
  %v187 = vadd.f32 0.0, %v186
  %v188 = vpop.f32.mrb[0].mxu0
  %v189 = vpop.f32.mrb[0].mxu0
  %v190 = vadd.f32 0.0, %v189
  %v191 = vpop.f32.mrb[0].mxu0
  %192 = vdwg.mxu0
  %v193 = vadd.f32 %v131, %v134
  %v194 = vadd.f32 %v193, %v139
  %v195 = vadd.f32 %v194, %v142
  %v196 = vadd.f32 %v195, %v147
  %v197 = vadd.f32 %v196, %v150
  %v198 = vadd.f32 %v197, %v155
  %v199 = vadd.f32 %v198, %v158
  %v200 = vadd.f32 %v199, %v163
  %v201 = vadd.f32 %v200, %v166
  %v202 = vadd.f32 %v201, %v171
  %v203 = vadd.f32 %v202, %v174
  %v204 = vadd.f32 %v203, %v179
  %v205 = vadd.f32 %v204, %v182
  %v206 = vadd.f32 %v205, %v187
  %v207 = vadd.f32 %v206, %v190
  %v208 = vrot.slane %v207, 4
  %v209 = vadd.f32 %v207, %v208
  %v210 = vrot.slane %v209, 2
  %v211 = vadd.f32 %v209, %v210
  %v212 = vrot.slane %v211, 1
  %v213 = vadd.f32 %v211, %v212
  %v214 = vmul.f32 %v131, %v131
  %v215 = vmul.f32 %v134, %v134
  %v216 = vmul.f32 %v139, %v139
  %v217 = vmul.f32 %v142, %v142
  %v218 = vmul.f32 %v147, %v147
  %v219 = vmul.f32 %v150, %v150
  %v220 = vmul.f32 %v155, %v155
  %v221 = vmul.f32 %v158, %v158
  %v222 = vmul.f32 %v163, %v163
  %v223 = vmul.f32 %v166, %v166
  %v224 = vmul.f32 %v171, %v171
  %v225 = vmul.f32 %v174, %v174
  %v226 = vmul.f32 %v179, %v179
  %v227 = vmul.f32 %v182, %v182
  %v228 = vmul.f32 %v187, %v187
  %v229 = vmul.f32 %v190, %v190
  %v230 = vadd.f32 %v214, %v215
  %v231 = vadd.f32 %v230, %v216
  %v232 = vadd.f32 %v231, %v217
  %v233 = vadd.f32 %v232, %v218
  %v234 = vadd.f32 %v233, %v219
  %v235 = vadd.f32 %v234, %v220
  %v236 = vadd.f32 %v235, %v221
  %v237 = vadd.f32 %v236, %v222
  %v238 = vadd.f32 %v237, %v223
  %v239 = vadd.f32 %v238, %v224
  %v240 = vadd.f32 %v239, %v225
  %v241 = vadd.f32 %v240, %v226
  %v242 = vadd.f32 %v241, %v227
  %v243 = vadd.f32 %v242, %v228
  %v244 = vadd.f32 %v243, %v229
  %v245 = vrot.slane %v244, 4
  %v246 = vadd.f32 %v244, %v245
  %v247 = vrot.slane %v246, 2
  %v248 = vadd.f32 %v246, %v247
  %v249 = vrot.slane %v248, 1
  %v250 = vadd.f32 %v248, %v249
  %v251 = vmul.f32 %v213, 0.0078125
  %v252 = vmul.f32 %v250, 0.0078125
  %v253 = vmul.f32 %v251, %v251
  %v254 = vsub.f32 %v252, %v253
  %v255 = vmax.f32 %v254, 0.0
  %v256 = vld [vmem:[%s2] sm:$0x1]
  %v257 = vadd.f32 %v255, 1e-05
  %v258 = vrsqrt.pop %v257
  %v259 = vmul.f32 %v256, %v258
  %v260 = vld [vmem:[%s3] sm:$0x1]
  %v261 = vmul.f32 %v251, %v259
  %v262 = vsub.f32 %v260, %v261
  %v264 = vlaneseq
  %v265 = vshrl.u32 %v264, 7
  %v266 = vsub.s32 0, %v265
  %v267 = vrot.slane %v259, %v266
  %v269 = vmul.f32 %v131, %v267
  %v270 = vmul.f32 %v134, %v267
  %v271 = vmul.f32 %v139, %v267
  %v272 = vmul.f32 %v142, %v267
  %v273 = vmul.f32 %v147, %v267
  %v274 = vmul.f32 %v150, %v267
  %v275 = vmul.f32 %v155, %v267
  %v276 = vmul.f32 %v158, %v267
  %v277 = vmul.f32 %v163, %v267
  %v278 = vmul.f32 %v166, %v267
  %v279 = vmul.f32 %v171, %v267
  %v280 = vmul.f32 %v174, %v267
  %v281 = vmul.f32 %v179, %v267
  %v282 = vmul.f32 %v182, %v267
  %v283 = vmul.f32 %v187, %v267
  %v284 = vmul.f32 %v190, %v267
  %v286 = vlaneseq
  %v287 = vshrl.u32 %v286, 7
  %v288 = vsub.s32 0, %v287
  %v289 = vrot.slane %v262, %v288
  %v291 = vadd.f32 %v269, %v289
  %v292 = vadd.f32 %v270, %v289
  %v293 = vadd.f32 %v271, %v289
  %v294 = vadd.f32 %v272, %v289
  %v295 = vadd.f32 %v273, %v289
  %v296 = vadd.f32 %v274, %v289
  %v297 = vadd.f32 %v275, %v289
  %v298 = vadd.f32 %v276, %v289
  %v299 = vadd.f32 %v277, %v289
  %v300 = vadd.f32 %v278, %v289
  %v301 = vadd.f32 %v279, %v289
  %v302 = vadd.f32 %v280, %v289
  %v303 = vadd.f32 %v281, %v289
  %v304 = vadd.f32 %v282, %v289
  %v305 = vadd.f32 %v283, %v289
  %v306 = vadd.f32 %v284, %v289
  %v307 = vmax.f32 %v291, 0.0
  %v308 = vmax.f32 %v292, 0.0
  %v309 = vmax.f32 %v293, 0.0
  %v310 = vmax.f32 %v294, 0.0
  %v311 = vmax.f32 %v295, 0.0
  %v312 = vmax.f32 %v296, 0.0
  %v313 = vmax.f32 %v297, 0.0
  %v314 = vmax.f32 %v298, 0.0
  %v315 = vmax.f32 %v299, 0.0
  %v316 = vmax.f32 %v300, 0.0
  %v317 = vmax.f32 %v301, 0.0
  %v318 = vmax.f32 %v302, 0.0
  %v319 = vmax.f32 %v303, 0.0
  %v320 = vmax.f32 %v304, 0.0
  %v321 = vmax.f32 %v305, 0.0
  %v322 = vmax.f32 %v306, 0.0
  %v323 = vpack.c.bf16 %v308, %v307
  %v324 = vpack.c.bf16 %v310, %v309
  %v325 = vpack.c.bf16 %v312, %v311
  %v326 = vpack.c.bf16 %v314, %v313
  %v327 = vpack.c.bf16 %v316, %v315
  %v328 = vpack.c.bf16 %v318, %v317
  %v329 = vpack.c.bf16 %v320, %v319
  %v330 = vpack.c.bf16 %v322, %v321
  %v331 = vld [vmem:[%s4] sm:$0xf]
  %v332 = vld [vmem:[%s4 + $0x4] sm:$0xf]
  %v333 = vld [vmem:[%s4 + $0x8] sm:$0xf]
  %v334 = vld [vmem:[%s4 + $0xc] sm:$0xf]
  %v335 = vld [vmem:[%s4 + $0x10] sm:$0xf]
  %v336 = vld [vmem:[%s4 + $0x14] sm:$0xf]
  %v337 = vld [vmem:[%s4 + $0x18] sm:$0xf]
  %v338 = vld [vmem:[%s4 + $0x1c] sm:$0xf]
  %v339 = vld [vmem:[%s4 + $0x20] sm:$0xf]
  %v340 = vld [vmem:[%s4 + $0x24] sm:$0xf]
  %v341 = vld [vmem:[%s4 + $0x28] sm:$0xf]
  %v342 = vld [vmem:[%s4 + $0x2c] sm:$0xf]
  %v343 = vld [vmem:[%s4 + $0x30] sm:$0xf]
  %v344 = vld [vmem:[%s4 + $0x34] sm:$0xf]
  %v345 = vld [vmem:[%s4 + $0x38] sm:$0xf]
  %v346 = vld [vmem:[%s4 + $0x3c] sm:$0xf]
  %v363 = vunpack.c.l.b16 %v331
  %v364 = vunpack.c.l.b16 %v332
  %v365 = vunpack.c.l.b16 %v333
  %v366 = vunpack.c.l.b16 %v334
  %v367 = vunpack.c.l.b16 %v335
  %v368 = vunpack.c.l.b16 %v336
  %v369 = vunpack.c.l.b16 %v337
  %v370 = vunpack.c.l.b16 %v338
  %v371 = vunpack.c.l.b16 %v339
  %v372 = vunpack.c.l.b16 %v340
  %v373 = vunpack.c.l.b16 %v341
  %v374 = vunpack.c.l.b16 %v342
  %v375 = vunpack.c.l.b16 %v343
  %v376 = vunpack.c.l.b16 %v344
  %v377 = vunpack.c.l.b16 %v345
  %v378 = vunpack.c.l.b16 %v346
  %v379 = vpack.c.b16 %v364, %v363
  %v380 = vpack.c.b16 %v366, %v365
  %v381 = vpack.c.b16 %v368, %v367
  %v382 = vpack.c.b16 %v370, %v369
  %v383 = vpack.c.b16 %v372, %v371
  %v384 = vpack.c.b16 %v374, %v373
  %v385 = vpack.c.b16 %v376, %v375
  %v386 = vpack.c.b16 %v378, %v377
  %395 = vmatprep.subr.bf16.mxu0 0
  %396 = vmatpush1.bf16.msra.mxu0 %v379
  %397 = vmatprep.subr.bf16.mxu0 0
  %398 = vmatpush1.bf16.msra.mxu0 %v380
  %399 = vmatprep.subr.bf16.mxu0 0
  %400 = vmatpush1.bf16.msra.mxu0 %v381
  %401 = vmatprep.subr.bf16.mxu0 0
  %402 = vmatpush1.bf16.msra.mxu0 %v382
  %403 = vmatprep.subr.bf16.mxu0 0
  %404 = vmatpush1.bf16.msra.mxu0 %v383
  %405 = vmatprep.subr.bf16.mxu0 0
  %406 = vmatpush1.bf16.msra.mxu0 %v384
  %407 = vmatprep.subr.bf16.mxu0 0
  %408 = vmatpush1.bf16.msra.mxu0 %v385
  %409 = vmatprep.subr.bf16.mxu0 0
  %410 = vmatpush1.bf16.msra.mxu0 %v386
  %411 = vmatprep.subr.bf16.mxu0 0
  %412 = vmatpush1.bf16.msra.mxu0 0
  %413 = vmatprep.subr.bf16.mxu0 0
  %414 = vmatpush1.bf16.msra.mxu0 0
  %415 = vmatprep.subr.bf16.mxu0 0
  %416 = vmatpush1.bf16.msra.mxu0 0
  %417 = vmatprep.subr.bf16.mxu0 0
  %418 = vmatpush1.bf16.msra.mxu0 0
  %419 = vmatprep.subr.bf16.mxu0 0
  %420 = vmatpush1.bf16.msra.mxu0 0
  %421 = vmatprep.subr.bf16.mxu0 0
  %422 = vmatpush1.bf16.msra.mxu0 0
  %423 = vmatprep.subr.bf16.mxu0 0
  %424 = vmatpush1.bf16.msra.mxu0 0
  %425 = vmatprep.subr.bf16.mxu0 0
  %426 = vmatpush1.bf16.msra.mxu0 0
  %427 = vmatprep.mubr.bf16.mxu0 0
  %428 = vmatmul.mubr.bf16.gmra.mrb[0].mxu0 %v323
  %v429 = vpop.f32.mrb[0].mxu0
  %v430 = vadd.f32 0.0, %v429
  %v431 = vpop.f32.mrb[0].mxu0
  %v432 = vpop.f32.mrb[0].mxu0
  %v433 = vadd.f32 0.0, %v432
  %v434 = vpop.f32.mrb[0].mxu0
  %435 = vmatprep.mubr.bf16.mxu0 0
  %436 = vmatmul.mubr.bf16.gmra.mrb[0].mxu0 %v324
  %v437 = vpop.f32.mrb[0].mxu0
  %v438 = vadd.f32 0.0, %v437
  %v439 = vpop.f32.mrb[0].mxu0
  %v440 = vpop.f32.mrb[0].mxu0
  %v441 = vadd.f32 0.0, %v440
  %v442 = vpop.f32.mrb[0].mxu0
  %443 = vmatprep.mubr.bf16.mxu0 0
  %444 = vmatmul.mubr.bf16.gmra.mrb[0].mxu0 %v325
  %v445 = vpop.f32.mrb[0].mxu0
  %v446 = vadd.f32 0.0, %v445
  %v447 = vpop.f32.mrb[0].mxu0
  %v448 = vpop.f32.mrb[0].mxu0
  %v449 = vadd.f32 0.0, %v448
  %v450 = vpop.f32.mrb[0].mxu0
  %451 = vmatprep.mubr.bf16.mxu0 0
  %452 = vmatmul.mubr.bf16.gmra.mrb[0].mxu0 %v326
  %v453 = vpop.f32.mrb[0].mxu0
  %v454 = vadd.f32 0.0, %v453
  %v455 = vpop.f32.mrb[0].mxu0
  %v456 = vpop.f32.mrb[0].mxu0
  %v457 = vadd.f32 0.0, %v456
  %v458 = vpop.f32.mrb[0].mxu0
  %459 = vmatprep.mubr.bf16.mxu0 0
  %460 = vmatmul.mubr.bf16.gmra.mrb[0].mxu0 %v327
  %v461 = vpop.f32.mrb[0].mxu0
  %v462 = vadd.f32 0.0, %v461
  %v463 = vpop.f32.mrb[0].mxu0
  %v464 = vpop.f32.mrb[0].mxu0
  %v465 = vadd.f32 0.0, %v464
  %v466 = vpop.f32.mrb[0].mxu0
  %467 = vmatprep.mubr.bf16.mxu0 0
  %468 = vmatmul.mubr.bf16.gmra.mrb[0].mxu0 %v328
  %v469 = vpop.f32.mrb[0].mxu0
  %v470 = vadd.f32 0.0, %v469
  %v471 = vpop.f32.mrb[0].mxu0
  %v472 = vpop.f32.mrb[0].mxu0
  %v473 = vadd.f32 0.0, %v472
  %v474 = vpop.f32.mrb[0].mxu0
  %475 = vmatprep.mubr.bf16.mxu0 0
  %476 = vmatmul.mubr.bf16.gmra.mrb[0].mxu0 %v329
  %v477 = vpop.f32.mrb[0].mxu0
  %v478 = vadd.f32 0.0, %v477
  %v479 = vpop.f32.mrb[0].mxu0
  %v480 = vpop.f32.mrb[0].mxu0
  %v481 = vadd.f32 0.0, %v480
  %v482 = vpop.f32.mrb[0].mxu0
  %483 = vmatprep.mubr.bf16.mxu0 0
  %484 = vmatmul.mubr.bf16.gmra.mrb[0].mxu0 %v330
  %v485 = vpop.f32.mrb[0].mxu0
  %v486 = vadd.f32 0.0, %v485
  %v487 = vpop.f32.mrb[0].mxu0
  %v488 = vpop.f32.mrb[0].mxu0
  %v489 = vadd.f32 0.0, %v488
  %v490 = vpop.f32.mrb[0].mxu0
  %491 = vdwg.mxu0
  %vm492 = vcmask 523264
  %v493 = vsel %vm492, %v430, 0.0
  %v494 = vsel %vm492, %v433, 0.0
  %v495 = vadd.f32 %v493, %v494
  %v496 = vsel %vm492, %v438, 0.0
  %v497 = vadd.f32 %v495, %v496
  %v498 = vsel %vm492, %v441, 0.0
  %v499 = vadd.f32 %v497, %v498
  %v500 = vsel %vm492, %v446, 0.0
  %v501 = vadd.f32 %v499, %v500
  %v502 = vsel %vm492, %v449, 0.0
  %v503 = vadd.f32 %v501, %v502
  %v504 = vsel %vm492, %v454, 0.0
  %v505 = vadd.f32 %v503, %v504
  %v506 = vsel %vm492, %v457, 0.0
  %v507 = vadd.f32 %v505, %v506
  %v508 = vsel %vm492, %v462, 0.0
  %v509 = vadd.f32 %v507, %v508
  %v510 = vsel %vm492, %v465, 0.0
  %v511 = vadd.f32 %v509, %v510
  %v512 = vsel %vm492, %v470, 0.0
  %v513 = vadd.f32 %v511, %v512
  %v514 = vsel %vm492, %v473, 0.0
  %v515 = vadd.f32 %v513, %v514
  %v516 = vsel %vm492, %v478, 0.0
  %v517 = vadd.f32 %v515, %v516
  %v518 = vsel %vm492, %v481, 0.0
  %v519 = vadd.f32 %v517, %v518
  %v520 = vsel %vm492, %v486, 0.0
  %v521 = vadd.f32 %v519, %v520
  %v522 = vsel %vm492, %v489, 0.0
  %v523 = vadd.f32 %v521, %v522
  %v524 = vrot.slane %v523, 4
  %v525 = vadd.f32 %v523, %v524
  %v526 = vrot.slane %v525, 2
  %v527 = vadd.f32 %v525, %v526
  %v528 = vrot.slane %v527, 1
  %v529 = vadd.f32 %v527, %v528
  %v530 = vmul.f32 %v430, %v430
  %v531 = vmul.f32 %v433, %v433
  %v532 = vmul.f32 %v438, %v438
  %v533 = vmul.f32 %v441, %v441
  %v534 = vmul.f32 %v446, %v446
  %v535 = vmul.f32 %v449, %v449
  %v536 = vmul.f32 %v454, %v454
  %v537 = vmul.f32 %v457, %v457
  %v538 = vmul.f32 %v462, %v462
  %v539 = vmul.f32 %v465, %v465
  %v540 = vmul.f32 %v470, %v470
  %v541 = vmul.f32 %v473, %v473
  %v542 = vmul.f32 %v478, %v478
  %v543 = vmul.f32 %v481, %v481
  %v544 = vmul.f32 %v486, %v486
  %v545 = vmul.f32 %v489, %v489
  %v546 = vsel %vm492, %v530, 0.0
  %v547 = vsel %vm492, %v531, 0.0
  %v548 = vadd.f32 %v546, %v547
  %v549 = vsel %vm492, %v532, 0.0
  %v550 = vadd.f32 %v548, %v549
  %v551 = vsel %vm492, %v533, 0.0
  %v552 = vadd.f32 %v550, %v551
  %v553 = vsel %vm492, %v534, 0.0
  %v554 = vadd.f32 %v552, %v553
  %v555 = vsel %vm492, %v535, 0.0
  %v556 = vadd.f32 %v554, %v555
  %v557 = vsel %vm492, %v536, 0.0
  %v558 = vadd.f32 %v556, %v557
  %v559 = vsel %vm492, %v537, 0.0
  %v560 = vadd.f32 %v558, %v559
  %v561 = vsel %vm492, %v538, 0.0
  %v562 = vadd.f32 %v560, %v561
  %v563 = vsel %vm492, %v539, 0.0
  %v564 = vadd.f32 %v562, %v563
  %v565 = vsel %vm492, %v540, 0.0
  %v566 = vadd.f32 %v564, %v565
  %v567 = vsel %vm492, %v541, 0.0
  %v568 = vadd.f32 %v566, %v567
  %v569 = vsel %vm492, %v542, 0.0
  %v570 = vadd.f32 %v568, %v569
  %v571 = vsel %vm492, %v543, 0.0
  %v572 = vadd.f32 %v570, %v571
  %v573 = vsel %vm492, %v544, 0.0
  %v574 = vadd.f32 %v572, %v573
  %v575 = vsel %vm492, %v545, 0.0
  %v576 = vadd.f32 %v574, %v575
  %v577 = vrot.slane %v576, 4
  %v578 = vadd.f32 %v576, %v577
  %v579 = vrot.slane %v578, 2
  %v580 = vadd.f32 %v578, %v579
  %v581 = vrot.slane %v580, 1
  %v582 = vadd.f32 %v580, %v581
  %v583 = vmul.f32 %v529, 0.0078125
  %v584 = vmul.f32 %v582, 0.0078125
  %v585 = vmul.f32 %v583, %v583
  %v586 = vsub.f32 %v584, %v585
  %v587 = vmax.f32 %v586, 0.0
  %v588 = vld [vmem:[%s5] sm:$0x1]
  %v589 = vadd.f32 %v587, 1e-05
  %v590 = vrsqrt.pop %v589
  %v591 = vmul.f32 %v588, %v590
  %v592 = vld [vmem:[%s6] sm:$0x1]
  %v593 = vmul.f32 %v583, %v591
  %v594 = vsub.f32 %v592, %v593
  %v596 = vlaneseq
  %v597 = vshrl.u32 %v596, 7
  %v598 = vsub.s32 0, %v597
  %v599 = vrot.slane %v591, %v598
  %v601 = vmul.f32 %v430, %v599
  %v602 = vmul.f32 %v433, %v599
  %v603 = vmul.f32 %v438, %v599
  %v604 = vmul.f32 %v441, %v599
  %v605 = vmul.f32 %v446, %v599
  %v606 = vmul.f32 %v449, %v599
  %v607 = vmul.f32 %v454, %v599
  %v608 = vmul.f32 %v457, %v599
  %v609 = vmul.f32 %v462, %v599
  %v610 = vmul.f32 %v465, %v599
  %v611 = vmul.f32 %v470, %v599
  %v612 = vmul.f32 %v473, %v599
  %v613 = vmul.f32 %v478, %v599
  %v614 = vmul.f32 %v481, %v599
  %v615 = vmul.f32 %v486, %v599
  %v616 = vmul.f32 %v489, %v599
  %v618 = vlaneseq
  %v619 = vshrl.u32 %v618, 7
  %v620 = vsub.s32 0, %v619
  %v621 = vrot.slane %v594, %v620
  %v623 = vadd.f32 %v601, %v621
  %v624 = vadd.f32 %v602, %v621
  %v625 = vadd.f32 %v603, %v621
  %v626 = vadd.f32 %v604, %v621
  %v627 = vadd.f32 %v605, %v621
  %v628 = vadd.f32 %v606, %v621
  %v629 = vadd.f32 %v607, %v621
  %v630 = vadd.f32 %v608, %v621
  %v631 = vadd.f32 %v609, %v621
  %v632 = vadd.f32 %v610, %v621
  %v633 = vadd.f32 %v611, %v621
  %v634 = vadd.f32 %v612, %v621
  %v635 = vadd.f32 %v613, %v621
  %v636 = vadd.f32 %v614, %v621
  %v637 = vadd.f32 %v615, %v621
  %v638 = vadd.f32 %v616, %v621
  %v639 = vmax.f32 %v623, 0.0
  %v640 = vmax.f32 %v624, 0.0
  %v641 = vmax.f32 %v625, 0.0
  %v642 = vmax.f32 %v626, 0.0
  %v643 = vmax.f32 %v627, 0.0
  %v644 = vmax.f32 %v628, 0.0
  %v645 = vmax.f32 %v629, 0.0
  %v646 = vmax.f32 %v630, 0.0
  %v647 = vmax.f32 %v631, 0.0
  %v648 = vmax.f32 %v632, 0.0
  %v649 = vmax.f32 %v633, 0.0
  %v650 = vmax.f32 %v634, 0.0
  %v651 = vmax.f32 %v635, 0.0
  %v652 = vmax.f32 %v636, 0.0
  %v653 = vmax.f32 %v637, 0.0
  %v654 = vmax.f32 %v638, 0.0
  %v655 = vpack.c.bf16 %v640, %v639
  %v656 = vpack.c.bf16 %v642, %v641
  %v657 = vpack.c.bf16 %v644, %v643
  %v658 = vpack.c.bf16 %v646, %v645
  %v659 = vpack.c.bf16 %v648, %v647
  %v660 = vpack.c.bf16 %v650, %v649
  %v661 = vpack.c.bf16 %v652, %v651
  %v662 = vpack.c.bf16 %v654, %v653
  %v663 = vld [vmem:[%s7] sm:$0xf]
  %v664 = vld [vmem:[%s7 + $0x4] sm:$0xf]
  %v665 = vld [vmem:[%s7 + $0x8] sm:$0xf]
  %v666 = vld [vmem:[%s7 + $0xc] sm:$0xf]
  %v667 = vld [vmem:[%s7 + $0x10] sm:$0xf]
  %v668 = vld [vmem:[%s7 + $0x14] sm:$0xf]
  %v669 = vld [vmem:[%s7 + $0x18] sm:$0xf]
  %v670 = vld [vmem:[%s7 + $0x1c] sm:$0xf]
  %v679 = vunpack.c.l.b16 %v663
  %v680 = vunpack.c.l.b16 %v664
  %v681 = vunpack.c.l.b16 %v665
  %v682 = vunpack.c.l.b16 %v666
  %v683 = vunpack.c.l.b16 %v667
  %v684 = vunpack.c.l.b16 %v668
  %v685 = vunpack.c.l.b16 %v669
  %v686 = vunpack.c.l.b16 %v670
  %v687 = vpack.c.b16 %v680, %v679
  %v688 = vpack.c.b16 %v682, %v681
  %v689 = vpack.c.b16 %v684, %v683
  %v690 = vpack.c.b16 %v686, %v685
  %v696 = vsel %vm492, %v655, 0
  %v699 = vsel %vm492, %v656, 0
  %v702 = vsel %vm492, %v657, 0
  %v705 = vsel %vm492, %v658, 0
  %v708 = vsel %vm492, %v659, 0
  %v711 = vsel %vm492, %v660, 0
  %v714 = vsel %vm492, %v661, 0
  %v717 = vsel %vm492, %v662, 0
  %719 = vmatprep.subr.bf16.mxu0 0
  %720 = vmatpush1.bf16.msra.mxu0 %v687
  %721 = vmatprep.subr.bf16.mxu0 0
  %722 = vmatpush1.bf16.msra.mxu0 %v688
  %723 = vmatprep.subr.bf16.mxu0 0
  %724 = vmatpush1.bf16.msra.mxu0 %v689
  %725 = vmatprep.subr.bf16.mxu0 0
  %726 = vmatpush1.bf16.msra.mxu0 %v690
  %727 = vmatprep.subr.bf16.mxu0 0
  %728 = vmatpush1.bf16.msra.mxu0 0
  %729 = vmatprep.subr.bf16.mxu0 0
  %730 = vmatpush1.bf16.msra.mxu0 0
  %731 = vmatprep.subr.bf16.mxu0 0
  %732 = vmatpush1.bf16.msra.mxu0 0
  %733 = vmatprep.subr.bf16.mxu0 0
  %734 = vmatpush1.bf16.msra.mxu0 0
  %735 = vmatprep.subr.bf16.mxu0 0
  %736 = vmatpush1.bf16.msra.mxu0 0
  %737 = vmatprep.subr.bf16.mxu0 0
  %738 = vmatpush1.bf16.msra.mxu0 0
  %739 = vmatprep.subr.bf16.mxu0 0
  %740 = vmatpush1.bf16.msra.mxu0 0
  %741 = vmatprep.subr.bf16.mxu0 0
  %742 = vmatpush1.bf16.msra.mxu0 0
  %743 = vmatprep.subr.bf16.mxu0 0
  %744 = vmatpush1.bf16.msra.mxu0 0
  %745 = vmatprep.subr.bf16.mxu0 0
  %746 = vmatpush1.bf16.msra.mxu0 0
  %747 = vmatprep.subr.bf16.mxu0 0
  %748 = vmatpush1.bf16.msra.mxu0 0
  %749 = vmatprep.subr.bf16.mxu0 0
  %750 = vmatpush1.bf16.msra.mxu0 0
  %751 = vmatprep.mubr.bf16.mxu0 0
  %752 = vmatmul.mubr.bf16.gmra.mrb[0].mxu0 %v696
  %v753 = vpop.f32.mrb[0].mxu0
  %v754 = vadd.f32 0.0, %v753
  %v755 = vpop.f32.mrb[0].mxu0
  %v756 = vpop.f32.mrb[0].mxu0
  %v757 = vadd.f32 0.0, %v756
  %v758 = vpop.f32.mrb[0].mxu0
  %759 = vmatprep.mubr.bf16.mxu0 0
  %760 = vmatmul.mubr.bf16.gmra.mrb[0].mxu0 %v699
  %v761 = vpop.f32.mrb[0].mxu0
  %v762 = vadd.f32 0.0, %v761
  %v763 = vpop.f32.mrb[0].mxu0
  %v764 = vpop.f32.mrb[0].mxu0
  %v765 = vadd.f32 0.0, %v764
  %v766 = vpop.f32.mrb[0].mxu0
  %767 = vmatprep.mubr.bf16.mxu0 0
  %768 = vmatmul.mubr.bf16.gmra.mrb[0].mxu0 %v702
  %v769 = vpop.f32.mrb[0].mxu0
  %v770 = vadd.f32 0.0, %v769
  %v771 = vpop.f32.mrb[0].mxu0
  %v772 = vpop.f32.mrb[0].mxu0
  %v773 = vadd.f32 0.0, %v772
  %v774 = vpop.f32.mrb[0].mxu0
  %775 = vmatprep.mubr.bf16.mxu0 0
  %776 = vmatmul.mubr.bf16.gmra.mrb[0].mxu0 %v705
  %v777 = vpop.f32.mrb[0].mxu0
  %v778 = vadd.f32 0.0, %v777
  %v779 = vpop.f32.mrb[0].mxu0
  %v780 = vpop.f32.mrb[0].mxu0
  %v781 = vadd.f32 0.0, %v780
  %v782 = vpop.f32.mrb[0].mxu0
  %783 = vmatprep.mubr.bf16.mxu0 0
  %784 = vmatmul.mubr.bf16.gmra.mrb[0].mxu0 %v708
  %v785 = vpop.f32.mrb[0].mxu0
  %v786 = vadd.f32 0.0, %v785
  %v787 = vpop.f32.mrb[0].mxu0
  %v788 = vpop.f32.mrb[0].mxu0
  %v789 = vadd.f32 0.0, %v788
  %v790 = vpop.f32.mrb[0].mxu0
  %791 = vmatprep.mubr.bf16.mxu0 0
  %792 = vmatmul.mubr.bf16.gmra.mrb[0].mxu0 %v711
  %v793 = vpop.f32.mrb[0].mxu0
  %v794 = vadd.f32 0.0, %v793
  %v795 = vpop.f32.mrb[0].mxu0
  %v796 = vpop.f32.mrb[0].mxu0
  %v797 = vadd.f32 0.0, %v796
  %v798 = vpop.f32.mrb[0].mxu0
  %799 = vmatprep.mubr.bf16.mxu0 0
  %800 = vmatmul.mubr.bf16.gmra.mrb[0].mxu0 %v714
  %v801 = vpop.f32.mrb[0].mxu0
  %v802 = vadd.f32 0.0, %v801
  %v803 = vpop.f32.mrb[0].mxu0
  %v804 = vpop.f32.mrb[0].mxu0
  %v805 = vadd.f32 0.0, %v804
  %v806 = vpop.f32.mrb[0].mxu0
  %807 = vmatprep.mubr.bf16.mxu0 0
  %808 = vmatmul.mubr.bf16.gmra.mrb[0].mxu0 %v717
  %v809 = vpop.f32.mrb[0].mxu0
  %v810 = vadd.f32 0.0, %v809
  %v811 = vpop.f32.mrb[0].mxu0
  %v812 = vpop.f32.mrb[0].mxu0
  %v813 = vadd.f32 0.0, %v812
  %v814 = vpop.f32.mrb[0].mxu0
  %815 = vdwg.mxu0
  %vm816 = vcmask 261120
  %v817 = vsel %vm816, %v754, 0.0
  %v818 = vsel %vm816, %v757, 0.0
  %v819 = vadd.f32 %v817, %v818
  %v820 = vsel %vm816, %v762, 0.0
  %v821 = vadd.f32 %v819, %v820
  %v822 = vsel %vm816, %v765, 0.0
  %v823 = vadd.f32 %v821, %v822
  %v824 = vsel %vm816, %v770, 0.0
  %v825 = vadd.f32 %v823, %v824
  %v826 = vsel %vm816, %v773, 0.0
  %v827 = vadd.f32 %v825, %v826
  %v828 = vsel %vm816, %v778, 0.0
  %v829 = vadd.f32 %v827, %v828
  %v830 = vsel %vm816, %v781, 0.0
  %v831 = vadd.f32 %v829, %v830
  %v832 = vsel %vm816, %v786, 0.0
  %v833 = vadd.f32 %v831, %v832
  %v834 = vsel %vm816, %v789, 0.0
  %v835 = vadd.f32 %v833, %v834
  %v836 = vsel %vm816, %v794, 0.0
  %v837 = vadd.f32 %v835, %v836
  %v838 = vsel %vm816, %v797, 0.0
  %v839 = vadd.f32 %v837, %v838
  %v840 = vsel %vm816, %v802, 0.0
  %v841 = vadd.f32 %v839, %v840
  %v842 = vsel %vm816, %v805, 0.0
  %v843 = vadd.f32 %v841, %v842
  %v844 = vsel %vm816, %v810, 0.0
  %v845 = vadd.f32 %v843, %v844
  %v846 = vsel %vm816, %v813, 0.0
  %v847 = vadd.f32 %v845, %v846
  %v848 = vrot.slane %v847, 4
  %v849 = vadd.f32 %v847, %v848
  %v850 = vrot.slane %v849, 2
  %v851 = vadd.f32 %v849, %v850
  %v852 = vrot.slane %v851, 1
  %v853 = vadd.f32 %v851, %v852
  %v854 = vmul.f32 %v754, %v754
  %v855 = vmul.f32 %v757, %v757
  %v856 = vmul.f32 %v762, %v762
  %v857 = vmul.f32 %v765, %v765
  %v858 = vmul.f32 %v770, %v770
  %v859 = vmul.f32 %v773, %v773
  %v860 = vmul.f32 %v778, %v778
  %v861 = vmul.f32 %v781, %v781
  %v862 = vmul.f32 %v786, %v786
  %v863 = vmul.f32 %v789, %v789
  %v864 = vmul.f32 %v794, %v794
  %v865 = vmul.f32 %v797, %v797
  %v866 = vmul.f32 %v802, %v802
  %v867 = vmul.f32 %v805, %v805
  %v868 = vmul.f32 %v810, %v810
  %v869 = vmul.f32 %v813, %v813
  %v870 = vsel %vm816, %v854, 0.0
  %v871 = vsel %vm816, %v855, 0.0
  %v872 = vadd.f32 %v870, %v871
  %v873 = vsel %vm816, %v856, 0.0
  %v874 = vadd.f32 %v872, %v873
  %v875 = vsel %vm816, %v857, 0.0
  %v876 = vadd.f32 %v874, %v875
  %v877 = vsel %vm816, %v858, 0.0
  %v878 = vadd.f32 %v876, %v877
  %v879 = vsel %vm816, %v859, 0.0
  %v880 = vadd.f32 %v878, %v879
  %v881 = vsel %vm816, %v860, 0.0
  %v882 = vadd.f32 %v880, %v881
  %v883 = vsel %vm816, %v861, 0.0
  %v884 = vadd.f32 %v882, %v883
  %v885 = vsel %vm816, %v862, 0.0
  %v886 = vadd.f32 %v884, %v885
  %v887 = vsel %vm816, %v863, 0.0
  %v888 = vadd.f32 %v886, %v887
  %v889 = vsel %vm816, %v864, 0.0
  %v890 = vadd.f32 %v888, %v889
  %v891 = vsel %vm816, %v865, 0.0
  %v892 = vadd.f32 %v890, %v891
  %v893 = vsel %vm816, %v866, 0.0
  %v894 = vadd.f32 %v892, %v893
  %v895 = vsel %vm816, %v867, 0.0
  %v896 = vadd.f32 %v894, %v895
  %v897 = vsel %vm816, %v868, 0.0
  %v898 = vadd.f32 %v896, %v897
  %v899 = vsel %vm816, %v869, 0.0
  %v900 = vadd.f32 %v898, %v899
  %v901 = vrot.slane %v900, 4
  %v902 = vadd.f32 %v900, %v901
  %v903 = vrot.slane %v902, 2
  %v904 = vadd.f32 %v902, %v903
  %v905 = vrot.slane %v904, 1
  %v906 = vadd.f32 %v904, %v905
  %v907 = vmul.f32 %v853, 0.0078125
  %v908 = vmul.f32 %v906, 0.0078125
  %v909 = vmul.f32 %v907, %v907
  %v910 = vsub.f32 %v908, %v909
  %v911 = vmax.f32 %v910, 0.0
  %v912 = vld [vmem:[%s8] sm:$0x1]
  %v913 = vadd.f32 %v911, 1e-05
  %v914 = vrsqrt.pop %v913
  %v915 = vmul.f32 %v912, %v914
  %v916 = vld [vmem:[%s9] sm:$0x1]
  %v917 = vmul.f32 %v907, %v915
  %v918 = vsub.f32 %v916, %v917
  %v920 = vlaneseq
  %v921 = vshrl.u32 %v920, 7
  %v922 = vsub.s32 0, %v921
  %v923 = vrot.slane %v915, %v922
  %v925 = vmul.f32 %v754, %v923
  %v926 = vmul.f32 %v757, %v923
  %v927 = vmul.f32 %v762, %v923
  %v928 = vmul.f32 %v765, %v923
  %v929 = vmul.f32 %v770, %v923
  %v930 = vmul.f32 %v773, %v923
  %v931 = vmul.f32 %v778, %v923
  %v932 = vmul.f32 %v781, %v923
  %v933 = vmul.f32 %v786, %v923
  %v934 = vmul.f32 %v789, %v923
  %v935 = vmul.f32 %v794, %v923
  %v936 = vmul.f32 %v797, %v923
  %v937 = vmul.f32 %v802, %v923
  %v938 = vmul.f32 %v805, %v923
  %v939 = vmul.f32 %v810, %v923
  %v940 = vmul.f32 %v813, %v923
  %v942 = vlaneseq
  %v943 = vshrl.u32 %v942, 7
  %v944 = vsub.s32 0, %v943
  %v945 = vrot.slane %v918, %v944
  %v947 = vadd.f32 %v925, %v945
  %v948 = vadd.f32 %v926, %v945
  %v949 = vadd.f32 %v927, %v945
  %v950 = vadd.f32 %v928, %v945
  %v951 = vadd.f32 %v929, %v945
  %v952 = vadd.f32 %v930, %v945
  %v953 = vadd.f32 %v931, %v945
  %v954 = vadd.f32 %v932, %v945
  %v955 = vadd.f32 %v933, %v945
  %v956 = vadd.f32 %v934, %v945
  %v957 = vadd.f32 %v935, %v945
  %v958 = vadd.f32 %v936, %v945
  %v959 = vadd.f32 %v937, %v945
  %v960 = vadd.f32 %v938, %v945
  %v961 = vadd.f32 %v939, %v945
  %v962 = vadd.f32 %v940, %v945
  %v963 = vmax.f32 %v947, 0.0
  %v964 = vmax.f32 %v948, 0.0
  %v965 = vmax.f32 %v949, 0.0
  %v966 = vmax.f32 %v950, 0.0
  %v967 = vmax.f32 %v951, 0.0
  %v968 = vmax.f32 %v952, 0.0
  %v969 = vmax.f32 %v953, 0.0
  %v970 = vmax.f32 %v954, 0.0
  %v971 = vmax.f32 %v955, 0.0
  %v972 = vmax.f32 %v956, 0.0
  %v973 = vmax.f32 %v957, 0.0
  %v974 = vmax.f32 %v958, 0.0
  %v975 = vmax.f32 %v959, 0.0
  %v976 = vmax.f32 %v960, 0.0
  %v977 = vmax.f32 %v961, 0.0
  %v978 = vmax.f32 %v962, 0.0
  %v979 = vpack.c.bf16 %v964, %v963
  %v980 = vpack.c.bf16 %v966, %v965
  %v981 = vpack.c.bf16 %v968, %v967
  %v982 = vpack.c.bf16 %v970, %v969
  %v983 = vpack.c.bf16 %v972, %v971
  %v984 = vpack.c.bf16 %v974, %v973
  %v985 = vpack.c.bf16 %v976, %v975
  %v986 = vpack.c.bf16 %v978, %v977
  %v987 = vld [vmem:[%s10] sm:$0xf]
  %v988 = vld [vmem:[%s10 + $0x4] sm:$0xf]
  %v989 = vld [vmem:[%s10 + $0x8] sm:$0xf]
  %v990 = vld [vmem:[%s10 + $0xc] sm:$0xf]
  %v991 = vld [vmem:[%s11] sm:$0x1]
  %v993 = vlaneseq
  %v994 = vshrl.u32 %v993, 7
  %v995 = vsub.s32 0, %v994
  %v996 = vrot.slane %v991, %v995
  %v1002 = vunpack.c.l.b16 %v987
  %v1003 = vunpack.c.l.b16 %v988
  %v1004 = vunpack.c.l.b16 %v989
  %v1005 = vunpack.c.l.b16 %v990
  %v1006 = vpack.c.b16 %v1003, %v1002
  %v1007 = vpack.c.b16 %v1005, %v1004
  %v1011 = vsel %vm816, %v979, 0
  %v1014 = vsel %vm816, %v980, 0
  %v1017 = vsel %vm816, %v981, 0
  %v1020 = vsel %vm816, %v982, 0
  %v1023 = vsel %vm816, %v983, 0
  %v1026 = vsel %vm816, %v984, 0
  %v1029 = vsel %vm816, %v985, 0
  %v1032 = vsel %vm816, %v986, 0
  %1034 = vmatprep.subr.bf16.mxu0 0
  %1035 = vmatpush1.bf16.msra.mxu0 %v1006
  %1036 = vmatprep.subr.bf16.mxu0 0
  %1037 = vmatpush1.bf16.msra.mxu0 %v1007
  %1038 = vmatprep.subr.bf16.mxu0 0
  %1039 = vmatpush1.bf16.msra.mxu0 0
  %1040 = vmatprep.subr.bf16.mxu0 0
  %1041 = vmatpush1.bf16.msra.mxu0 0
  %1042 = vmatprep.subr.bf16.mxu0 0
  %1043 = vmatpush1.bf16.msra.mxu0 0
  %1044 = vmatprep.subr.bf16.mxu0 0
  %1045 = vmatpush1.bf16.msra.mxu0 0
  %1046 = vmatprep.subr.bf16.mxu0 0
  %1047 = vmatpush1.bf16.msra.mxu0 0
  %1048 = vmatprep.subr.bf16.mxu0 0
  %1049 = vmatpush1.bf16.msra.mxu0 0
  %1050 = vmatprep.subr.bf16.mxu0 0
  %1051 = vmatpush1.bf16.msra.mxu0 0
  %1052 = vmatprep.subr.bf16.mxu0 0
  %1053 = vmatpush1.bf16.msra.mxu0 0
  %1054 = vmatprep.subr.bf16.mxu0 0
  %1055 = vmatpush1.bf16.msra.mxu0 0
  %1056 = vmatprep.subr.bf16.mxu0 0
  %1057 = vmatpush1.bf16.msra.mxu0 0
  %1058 = vmatprep.subr.bf16.mxu0 0
  %1059 = vmatpush1.bf16.msra.mxu0 0
  %1060 = vmatprep.subr.bf16.mxu0 0
  %1061 = vmatpush1.bf16.msra.mxu0 0
  %1062 = vmatprep.subr.bf16.mxu0 0
  %1063 = vmatpush1.bf16.msra.mxu0 0
  %1064 = vmatprep.subr.bf16.mxu0 0
  %1065 = vmatpush1.bf16.msra.mxu0 0
  %1066 = vmatprep.mubr.bf16.mxu0 0
  %1067 = vmatmul.mubr.bf16.gmra.mrb[0].mxu0 %v1011
  %v1068 = vpop.f32.mrb[0].mxu0
  %v1069 = vadd.f32 %v996, %v1068
  %v1070 = vpop.f32.mrb[0].mxu0
  %v1071 = vpop.f32.mrb[0].mxu0
  %v1072 = vadd.f32 %v996, %v1071
  %v1073 = vpop.f32.mrb[0].mxu0
  %1074 = vmatprep.mubr.bf16.mxu0 0
  %1075 = vmatmul.mubr.bf16.gmra.mrb[0].mxu0 %v1014
  %v1076 = vpop.f32.mrb[0].mxu0
  %v1077 = vadd.f32 %v996, %v1076
  %v1078 = vpop.f32.mrb[0].mxu0
  %v1079 = vpop.f32.mrb[0].mxu0
  %v1080 = vadd.f32 %v996, %v1079
  %v1081 = vpop.f32.mrb[0].mxu0
  %1082 = vmatprep.mubr.bf16.mxu0 0
  %1083 = vmatmul.mubr.bf16.gmra.mrb[0].mxu0 %v1017
  %v1084 = vpop.f32.mrb[0].mxu0
  %v1085 = vadd.f32 %v996, %v1084
  %v1086 = vpop.f32.mrb[0].mxu0
  %v1087 = vpop.f32.mrb[0].mxu0
  %v1088 = vadd.f32 %v996, %v1087
  %v1089 = vpop.f32.mrb[0].mxu0
  %1090 = vmatprep.mubr.bf16.mxu0 0
  %1091 = vmatmul.mubr.bf16.gmra.mrb[0].mxu0 %v1020
  %v1092 = vpop.f32.mrb[0].mxu0
  %v1093 = vadd.f32 %v996, %v1092
  %v1094 = vpop.f32.mrb[0].mxu0
  %v1095 = vpop.f32.mrb[0].mxu0
  %v1096 = vadd.f32 %v996, %v1095
  %v1097 = vpop.f32.mrb[0].mxu0
  %1098 = vmatprep.mubr.bf16.mxu0 0
  %1099 = vmatmul.mubr.bf16.gmra.mrb[0].mxu0 %v1023
  %v1100 = vpop.f32.mrb[0].mxu0
  %v1101 = vadd.f32 %v996, %v1100
  %v1102 = vpop.f32.mrb[0].mxu0
  %v1103 = vpop.f32.mrb[0].mxu0
  %v1104 = vadd.f32 %v996, %v1103
  %v1105 = vpop.f32.mrb[0].mxu0
  %1106 = vmatprep.mubr.bf16.mxu0 0
  %1107 = vmatmul.mubr.bf16.gmra.mrb[0].mxu0 %v1026
  %v1108 = vpop.f32.mrb[0].mxu0
  %v1109 = vadd.f32 %v996, %v1108
  %v1110 = vpop.f32.mrb[0].mxu0
  %v1111 = vpop.f32.mrb[0].mxu0
  %v1112 = vadd.f32 %v996, %v1111
  %v1113 = vpop.f32.mrb[0].mxu0
  %1114 = vmatprep.mubr.bf16.mxu0 0
  %1115 = vmatmul.mubr.bf16.gmra.mrb[0].mxu0 %v1029
  %v1116 = vpop.f32.mrb[0].mxu0
  %v1117 = vadd.f32 %v996, %v1116
  %v1118 = vpop.f32.mrb[0].mxu0
  %v1119 = vpop.f32.mrb[0].mxu0
  %v1120 = vadd.f32 %v996, %v1119
  %v1121 = vpop.f32.mrb[0].mxu0
  %1122 = vmatprep.mubr.bf16.mxu0 0
  %1123 = vmatmul.mubr.bf16.gmra.mrb[0].mxu0 %v1032
  %v1124 = vpop.f32.mrb[0].mxu0
  %v1125 = vadd.f32 %v996, %v1124
  %v1126 = vpop.f32.mrb[0].mxu0
  %v1127 = vpop.f32.mrb[0].mxu0
  %v1128 = vadd.f32 %v996, %v1127
  %v1129 = vpop.f32.mrb[0].mxu0
  %1130 = vdwg.mxu0
  %vm1131 = vcmask 15360
  %1132 = vst.msk [vmem:[%s12] sm:$0xff] %vm1131, %v1069
  %1133 = vst.msk [vmem:[%s12 + $0x8] sm:$0xff] %vm1131, %v1072
  %1134 = vst.msk [vmem:[%s12 + $0x10] sm:$0xff] %vm1131, %v1077
  %1135 = vst.msk [vmem:[%s12 + $0x18] sm:$0xff] %vm1131, %v1080
  %1136 = vst.msk [vmem:[%s12 + $0x20] sm:$0xff] %vm1131, %v1085
  %1137 = vst.msk [vmem:[%s12 + $0x28] sm:$0xff] %vm1131, %v1088
  %1138 = vst.msk [vmem:[%s12 + $0x30] sm:$0xff] %vm1131, %v1093
  %1139 = vst.msk [vmem:[%s12 + $0x38] sm:$0xff] %vm1131, %v1096
  %1140 = vst.msk [vmem:[%s12 + $0x40] sm:$0xff] %vm1131, %v1101
  %1141 = vst.msk [vmem:[%s12 + $0x48] sm:$0xff] %vm1131, %v1104
  %1142 = vst.msk [vmem:[%s12 + $0x50] sm:$0xff] %vm1131, %v1109
  %1143 = vst.msk [vmem:[%s12 + $0x58] sm:$0xff] %vm1131, %v1112
  %1144 = vst.msk [vmem:[%s12 + $0x60] sm:$0xff] %vm1131, %v1117
  %1145 = vst.msk [vmem:[%s12 + $0x68] sm:$0xff] %vm1131, %v1120
  %1146 = vst.msk [vmem:[%s12 + $0x70] sm:$0xff] %vm1131, %v1125
  %1147 = vst.msk [vmem:[%s12 + $0x78] sm:$0xff] %vm1131, %v1128
  // Predicated region
  $region50: #{tpu_custom_call.1} parent=0 // pred_check
    _
  $region51: #{tpu_custom_call.1} parent=0 // pred_check_branch
    %1149 = sbr.rel (0) target = $region53
  $region52: #{tpu_custom_call.1} parent=0 // pred_region
    _
  $region53: #{tpu_custom_call.1} parent=0 // pred_fallthru
    _
  // Predicated region
  $region54: #{tpu_custom_call.1} parent=0 // pred_check
    _
  $region55: #{tpu_custom_call.1} parent=0 // pred_check_branch
    %1151 = sbr.rel (0) target = $region57
  $region56: #{tpu_custom_call.1} parent=0 // pred_region
    _
  $region57: #{tpu_custom_call.1} parent=0 // pred_fallthru
    _

</llo_original>
